<compile_context>
chip_gen: v5e
topology: v5e:2x2
jax: 0.10.0
libtpu: 0.0.40
codegen_flags: <defaults>
</compile_context>

<pallas_src>
import functools

import jax
import jax.numpy as jnp
from jax import lax
from jax.experimental import pallas as pl
from jax.experimental.pallas import tpu as pltpu

EPS = 1e-5


def _pick_chunk(n, cap):
    """Largest multiple of 8 that divides n and is <= cap; falls back to n (full dim)."""
    for cand in range(min(cap, n), 7, -1):
        if cand % 8 == 0 and n % cand == 0:
            return cand
    return n


# --------------------- Pass 1: BN statistics (tiled, single pass) ---------------------
def _bn_stats_kernel(x_ref, stats_ref, acc_ref, *, n_elems):
    i = pl.program_id(0)

    @pl.when(i == 0)
    def _init():
        acc_ref[0] = jnp.float32(0.0)
        acc_ref[1] = jnp.float32(0.0)

    x = x_ref[...].astype(jnp.float32)
    acc_ref[0] += jnp.sum(x)
    acc_ref[1] += jnp.sum(x * x)

    @pl.when(i == pl.num_programs(0) - 1)
    def _finalize():
        mean = acc_ref[0] / n_elems
        var = acc_ref[1] / n_elems - mean * mean      # single-pass biased variance
        stats_ref[0] = mean
        stats_ref[1] = jnp.maximum(var, 0.0)


def bn_stats(x2):
    """x2: (M, F) float32 -> (2,) float32 = [mean, biased var] over all elements."""
    M, F = x2.shape
    rc = _pick_chunk(M, 512)
    kernel = functools.partial(_bn_stats_kernel, n_elems=float(M * F))
    return pl.pallas_call(
        kernel,
        out_shape=jax.ShapeDtypeStruct((2,), jnp.float32),
        grid_spec=pltpu.PrefetchScalarGridSpec(
            num_scalar_prefetch=0,
            grid=(M // rc,),
            in_specs=[pl.BlockSpec((rc, F), lambda i: (i, 0))],
            out_specs=pl.BlockSpec(memory_space=pltpu.MemorySpace.SMEM),
            scratch_shapes=[pltpu.SMEM((2,), jnp.float32)],
        ),
        compiler_params=pltpu.CompilerParams(dimension_semantics=("arbitrary",)),
    )(x2)


# -------------- Pass 2: hoisted input projection  gi = x @ W_proj + bias --------------
def _proj_kernel(x_ref, w_ref, b_ref, o_ref):
    o_ref[...] = (
        jnp.dot(x_ref[...], w_ref[...], preferred_element_type=jnp.float32) + b_ref[...]
    ).astype(o_ref.dtype)


def input_projection(x2, w_proj, bias_proj):
    """x2: (M, F); w_proj: (F, G); bias_proj: (1, G) -> (M, G)."""
    M, F = x2.shape
    G = w_proj.shape[1]
    rc = _pick_chunk(M, 512)
    return pl.pallas_call(
        _proj_kernel,
        out_shape=jax.ShapeDtypeStruct((M, G), jnp.float32),
        grid_spec=pltpu.PrefetchScalarGridSpec(
            num_scalar_prefetch=0,
            grid=(M // rc,),
            in_specs=[
                pl.BlockSpec((rc, F), lambda i: (i, 0)),
                pl.BlockSpec((F, G), lambda i: (0, 0)),   # weights resident
                pl.BlockSpec((1, G), lambda i: (0, 0)),   # bias resident
            ],
            out_specs=pl.BlockSpec((rc, G), lambda i: (i, 0)),
        ),
        compiler_params=pltpu.CompilerParams(dimension_semantics=("parallel",)),
    )(x2, w_proj, bias_proj)


# ---------------------- Pass 3: GRU recurrence (sequential over T) --------------------
def _gru_kernel(gi_ref, whh_ref, bhn_ref, o_ref, h_ref, *, hidden_dim, unroll):
    H = hidden_dim
    bc = o_ref.shape[0]
    tc = o_ref.shape[1]

    # New sequence block -> reset the hidden-state carry.
    @pl.when(pl.program_id(1) == 0)
    def _init():
        h_ref[...] = jnp.zeros_like(h_ref)

    whh = whh_ref[...]                                   # (H, 3H), resident across grid
    bhn = jnp.broadcast_to(bhn_ref[...], (bc, H))        # hoisted broadcast (n-gate b_hh)

    def step(t, h):
        # Input-path pre-activations precomputed in one big matmul; b_ih and the r/z
        # parts of b_hh are already folded in.
        gi_t = gi_ref[:, pl.ds(t, 1), :][:, 0, :]                        # (bc, 3H)
        gh = jnp.dot(h, whh, preferred_element_type=jnp.float32)         # only matmul in loop
        r = jax.nn.sigmoid(gi_t[:, 0:H] + gh[:, 0:H])
        z = jax.nn.sigmoid(gi_t[:, H:2 * H] + gh[:, H:2 * H])
        n = jnp.tanh(gi_t[:, 2 * H:] + r * (gh[:, 2 * H:] + bhn))
        h_new = (1.0 - z) * n + z * h
        o_ref[:, pl.ds(t, 1), :] = h_new[:, None, :].astype(o_ref.dtype)
        return h_new

    h_ref[...] = lax.fori_loop(0, tc, step, h_ref[...], unroll=unroll)


def gru_recurrence(gi, whh_t, bhh_n, hidden_dim, *, time_block=None, batch_block=None):
    """gi: (B, T, 3H); whh_t: (H, 3H); bhh_n: (1, H) -> (B, T, H)."""
    B, T, G = gi.shape
    H = hidden_dim
    bc = B if batch_block is None else batch_block       # on v7x use batch_block=B//2
    assert B % bc == 0
    tc = _pick_chunk(T, 128) if time_block is None else time_block
    assert T % tc == 0
    kernel = functools.partial(_gru_kernel, hidden_dim=H, unroll=bool(tc <= 16))
    return pl.pallas_call(
        kernel,
        out_shape=jax.ShapeDtypeStruct((B, T, H), jnp.float32),
        grid_spec=pltpu.PrefetchScalarGridSpec(
            num_scalar_prefetch=0,
            grid=(B // bc, T // tc),
            in_specs=[
                pl.BlockSpec((bc, tc, G), lambda b, t: (b, t, 0)),   # pipelined gi chunks
                pl.BlockSpec((H, G), lambda b, t: (0, 0)),           # W_hh resident
                pl.BlockSpec((1, H), lambda b, t: (0, 0)),           # b_hh (n gate) resident
            ],
            out_specs=pl.BlockSpec((bc, tc, H), lambda b, t: (b, t, 0)),
            scratch_shapes=[pltpu.VMEM((bc, H), jnp.float32)],       # h carry across T axis
        ),
        # batch blocks independent -> "parallel" (2 TCs on v7x); time carries h -> "arbitrary"
        compiler_params=pltpu.CompilerParams(
            dimension_semantics=("parallel", "arbitrary")),
    )(gi, whh_t, bhh_n)


# ----------------------------------- Full module --------------------------------------
def bn_gru_forward(x_nchw, params, *, time_block=None, batch_block=None):
    """x_nchw: (B, 1, T, F) -> (B, 1, T, H), matching BN_GRU.forward (training-mode BN)."""
    B, C, T, F = x_nchw.shape
    assert C == 1
    H = params["hidden_dim"]

    x2 = x_nchw.reshape(B * T, F).astype(jnp.float32)

    # (1) tiled single-pass batch statistics
    stats = bn_stats(x2)
    mean, var = stats[0], stats[1]

    # (2) fold scalar BN affine into the input projection (normalized x never materialized)
    a = params["bn_gamma"][0] * lax.rsqrt(var + EPS)
    c = params["bn_beta"][0] - a * mean
    wih_t = jnp.transpose(params["w_ih"])                 # (F, 3H)
    w_proj = a * wih_t
    b_hh = params["b_hh"]
    b_fold = jnp.concatenate([b_hh[: 2 * H], jnp.zeros((H,), jnp.float32)])
    bias_proj = (c * jnp.sum(wih_t, axis=0) + params["b_ih"] + b_fold).reshape(1, 3 * H)

    # (3) hoisted input projection: one large tiled matmul over all B*T rows
    gi = input_projection(x2, w_proj, bias_proj).reshape(B, T, 3 * H)

    # (4) sequential recurrence: only h @ W_hh on the serial critical path
    whh_t = jnp.transpose(params["w_hh"])                 # (H, 3H)
    bhh_n = b_hh[2 * H:].reshape(1, H)
    out = gru_recurrence(gi, whh_t, bhh_n, H,
                         time_block=time_block, batch_block=batch_block)
    return out[:, None, :, :]                             # (B, 1, T, H)


def init_params(key, input_dim, hidden_dim):
    k_ih, k_hh = jax.random.split(key)
    # weight_ih: xavier_uniform (3H, F); weight_hh: orthogonal (3H, H); biases: 0
    w_ih = jax.nn.initializers.glorot_uniform()(k_ih, (3 * hidden_dim, input_dim), jnp.float32)
    w_hh = jax.nn.initializers.orthogonal()(k_hh, (3 * hidden_dim, hidden_dim), jnp.float32)
    return {
        "bn_gamma": jnp.ones((1,), jnp.float32),
        "bn_beta": jnp.zeros((1,), jnp.float32),
        "w_ih": w_ih,
        "w_hh": w_hh,
        "b_ih": jnp.zeros((3 * hidden_dim,), jnp.float32),
        "b_hh": jnp.zeros((3 * hidden_dim,), jnp.float32),
        "hidden_dim": hidden_dim,
    }


# ------------------------------ pure-JAX reference check -------------------------------
def _reference_forward(x_nchw, params):
    B, _, T, F = x_nchw.shape
    H = params["hidden_dim"]
    x = x_nchw.reshape(B, T, F).astype(jnp.float32)
    mean = jnp.mean(x)
    var = jnp.mean(jnp.square(x - mean))
    xn = (x - mean) * lax.rsqrt(var + EPS) * params["bn_gamma"][0] + params["bn_beta"][0]
    wih, whh = params["w_ih"], params["w_hh"]
    bih, bhh = params["b_ih"], params["b_hh"]

    def cell(h, x_t):
        gi = x_t @ wih.T + bih
        gh = h @ whh.T + bhh
        r = jax.nn.sigmoid(gi[:, :H] + gh[:, :H])
        z = jax.nn.sigmoid(gi[:, H:2 * H] + gh[:, H:2 * H])
        n = jnp.tanh(gi[:, 2 * H:] + r * gh[:, 2 * H:])
        h_new = (1.0 - z) * n + z * h
        return h_new, h_new

    _, ys = lax.scan(cell, jnp.zeros((B, H), jnp.float32), jnp.transpose(xn, (1, 0, 2)))
    return jnp.transpose(ys, (1, 0, 2))[:, None, :, :]


if __name__ == "__main__":
    B, T, F, H = 2, 8, 16, 32
    key = jax.random.PRNGKey(0)
    k_x, k_p = jax.random.split(key)
    x = jax.random.normal(k_x, (B, 1, T, F), dtype=jnp.float32)
    params = init_params(k_p, input_dim=F, hidden_dim=H)

    out = jax.block_until_ready(bn_gru_forward(x, params))
    assert out.shape == (B, 1, T, H), out.shape
    assert bool(jnp.all(jnp.isfinite(out)))

    ref = _reference_forward(x, params)
    assert bool(jnp.allclose(out, ref, atol=2e-3, rtol=2e-3)), float(jnp.max(jnp.abs(out - ref)))
    print("KERNEL_OK")
</pallas_src>

<mosaic_0001>
module attributes {stable_mosaic.version = 11 : i64} {
  func.func @_bn_stats_kernel(%arg0: i32, %arg1: memref<16x16xf32, #tpu.memory_space<vmem>>, %arg2: memref<2xf32, #tpu.memory_space<smem>>, %arg3: memref<2xf32, #tpu.memory_space<smem>>) attributes {dimension_semantics = [#tpu.dimension_semantics<arbitrary>], iteration_bounds = array<i64: 1>, scalar_prefetch = 0 : i64, scratch_operands = 1 : i64, tpu.core_type = #tpu.core_type<tc>, window_params = [{transform_indices = @transform_0, window_bounds = array<i64: 16, 16>}, {transform_indices = @transform_1, window_bounds = array<i64: 2>}]} {
    %c0_i32 = arith.constant 0 : i32
    %0 = arith.cmpi eq, %arg0, %c0_i32 : i32
    %1 = arith.extui %0 : i1 to i32
    %c0_i32_0 = arith.constant 0 : i32
    %2 = arith.cmpi ne, %1, %c0_i32_0 : i32
    scf.if %2 {
      %cst_8 = arith.constant 0.000000e+00 : f32
      %c0_9 = arith.constant 0 : index
      %22 = memref.load %arg3[%c0_9] : memref<2xf32, #tpu.memory_space<smem>>
      memref.store %cst_8, %arg3[%c0_9] : memref<2xf32, #tpu.memory_space<smem>>
      %cst_10 = arith.constant 0.000000e+00 : f32
      %c1_11 = arith.constant 1 : index
      %23 = memref.load %arg3[%c1_11] : memref<2xf32, #tpu.memory_space<smem>>
      memref.store %cst_10, %arg3[%c1_11] : memref<2xf32, #tpu.memory_space<smem>>
    } else {
    }
    %c0 = arith.constant 0 : index
    %c0_1 = arith.constant 0 : index
    %3 = vector.load %arg1[%c0, %c0_1] : memref<16x16xf32, #tpu.memory_space<vmem>>, vector<16x16xf32>
    %c0_2 = arith.constant 0 : index
    %4 = memref.load %arg3[%c0_2] : memref<2xf32, #tpu.memory_space<smem>>
    %5 = vector.shape_cast %3 : vector<16x16xf32> to vector<1x16x16xf32>
    %cst = arith.constant dense<0.000000e+00> : vector<1xf32>
    %6 = vector.multi_reduction <add>, %5, %cst [1, 2] : vector<1x16x16xf32> to vector<1xf32>
    %7 = vector.shape_cast %6 : vector<1xf32> to vector<1x1x1xf32>
    %8 = vector.extract %7[0, 0, 0] : f32 from vector<1x1x1xf32>
    %9 = arith.addf %4, %8 : f32
    %c0_3 = arith.constant 0 : index
    %10 = memref.load %arg3[%c0_3] : memref<2xf32, #tpu.memory_space<smem>>
    memref.store %9, %arg3[%c0_3] : memref<2xf32, #tpu.memory_space<smem>>
    %c1 = arith.constant 1 : index
    %11 = memref.load %arg3[%c1] : memref<2xf32, #tpu.memory_space<smem>>
    %12 = arith.mulf %3, %3 : vector<16x16xf32>
    %13 = vector.shape_cast %12 : vector<16x16xf32> to vector<1x16x16xf32>
    %cst_4 = arith.constant dense<0.000000e+00> : vector<1xf32>
    %14 = vector.multi_reduction <add>, %13, %cst_4 [1, 2] : vector<1x16x16xf32> to vector<1xf32>
    %15 = vector.shape_cast %14 : vector<1xf32> to vector<1x1x1xf32>
    %16 = vector.extract %15[0, 0, 0] : f32 from vector<1x1x1xf32>
    %17 = arith.addf %11, %16 : f32
    %c1_5 = arith.constant 1 : index
    %18 = memref.load %arg3[%c1_5] : memref<2xf32, #tpu.memory_space<smem>>
    memref.store %17, %arg3[%c1_5] : memref<2xf32, #tpu.memory_space<smem>>
    %c0_i32_6 = arith.constant 0 : i32
    %19 = arith.cmpi eq, %arg0, %c0_i32_6 : i32
    %20 = arith.extui %19 : i1 to i32
    %c0_i32_7 = arith.constant 0 : i32
    %21 = arith.cmpi ne, %20, %c0_i32_7 : i32
    scf.if %21 {
      %c0_8 = arith.constant 0 : index
      %22 = memref.load %arg3[%c0_8] : memref<2xf32, #tpu.memory_space<smem>>
      %cst_9 = arith.constant 2.560000e+02 : f32
      %23 = arith.divf %22, %cst_9 : f32
      %c1_10 = arith.constant 1 : index
      %24 = memref.load %arg3[%c1_10] : memref<2xf32, #tpu.memory_space<smem>>
      %cst_11 = arith.constant 2.560000e+02 : f32
      %25 = arith.divf %24, %cst_11 : f32
      %26 = arith.mulf %23, %23 : f32
      %27 = arith.subf %25, %26 : f32
      %c0_12 = arith.constant 0 : index
      %28 = memref.load %arg2[%c0_12] : memref<2xf32, #tpu.memory_space<smem>>
      memref.store %23, %arg2[%c0_12] : memref<2xf32, #tpu.memory_space<smem>>
      %cst_13 = arith.constant 0.000000e+00 : f32
      %29 = arith.maximumf %27, %cst_13 : f32
      %c1_14 = arith.constant 1 : index
      %30 = memref.load %arg2[%c1_14] : memref<2xf32, #tpu.memory_space<smem>>
      memref.store %29, %arg2[%c1_14] : memref<2xf32, #tpu.memory_space<smem>>
    } else {
    }
    return
  }
  func.func @transform_0(%arg0: i32) -> (i32, i32) {
    %c0_i32 = arith.constant 0 : i32
    %c0_i32_0 = arith.constant 0 : i32
    return %arg0, %c0_i32 : i32, i32
  }
  func.func @transform_1(%arg0: i32) -> i32 {
    %c0_i32 = arith.constant 0 : i32
    %c0_i32_0 = arith.constant 0 : i32
    return %c0_i32 : i32
  }
}

</mosaic_0001>

<llo_original>
// kernel: tpu_custom_call.1
$region0: #{tpu_custom_call.1}
  #allocation0 [shape = 'u32[]', space=smem, size = 0x4, offset = 0x4, fixed_abs, tag = 'smem constant byte address 0x4 - core index']
  #allocation1 [shape = 'u32[72,128]{1,0:T(1,128)}', space=vmem, size = 0x9000, scoped, tag = 'internal scratch']
  #allocation2 [shape = 'f32[2]{0:T(128)}', space=smem, size = 0x200, scoped, tag = 'scratch operand']
  %s0 = inlined_call_operand.hbm [shape: f32[16,16], index: 0, kind: input, shape index: {}]
  %s1 = inlined_call_operand.hbm [shape: f32[2], index: 1, kind: output, shape index: {}]
  %s2 = sld [smem:[#allocation0]]
  $region26: #{tpu_custom_call.1} parent=0
    _
  %s4 = ssub.s32 1, %s2
  %s5 = scalar_select 0, %s4, %s2
  $region1: #{tpu_custom_call.1} parent=0
    #allocation3 [shape = 'u8[8192]{0}', space=vmem, size = 0x2000, scoped, tag = 'input window, operand 0, single buffered']
    #allocation4 [shape = 's32[1]{0}', space=sflag, size = 0x4, scoped, tag = 'scoped memory for tpu_custom_call.1']
    #allocation5 [shape = 's32[1]{0}', space=sflag, size = 0x4, scoped, tag = 'scoped memory for tpu_custom_call.1']
    #allocation6 [shape = 'u8[512]{0}', space=smem, size = 0x200, scoped, tag = 'output window, operand 0, single buffered']
    %6 = vsyncpa [#allocation4], 0
    %7 = vsyncpa [#allocation5], 0
    // Predicated region
    $region2: #{tpu_custom_call.1} parent=1 // pred_check
      _
    $region3: #{tpu_custom_call.1} parent=1 // pred_check_branch
      %9 = sbr.rel (0) target = $region5
    $region4: #{tpu_custom_call.1} parent=1 // pred_region
      %11 = vsyncadd [#allocation4], 0
      %s12 = sshll.u32 %s0, 4
      %s13 = int_to_ptr.hbm [resolvable:$true] %s12
      %s14 = sshll.u32 [#allocation3], 4
      %s15 = int_to_ptr.vmem [resolvable:$true] %s14
      %20 = dma.hbm_to_vmem [thread:$0]  %s13, 256, %s15, [#allocation4], 128, 128, 8
    $region5: #{tpu_custom_call.1} parent=1 // pred_fallthru
      _
    // Predicated region
    $region6: #{tpu_custom_call.1} parent=1 // pred_check
      _
    $region7: #{tpu_custom_call.1} parent=1 // pred_check_branch
      %22 = sbr.rel (0) target = $region9
    $region8: #{tpu_custom_call.1} parent=1 // pred_region
      %24 = dma.done [#allocation4], 256
    $region9: #{tpu_custom_call.1} parent=1 // pred_fallthru
      _
    %p25 = scmp.eq.s32.totalorder 0, 0
    // Predicated region
    $region10: #{tpu_custom_call.1} parent=1 // pred_check
      %p26 = pneg %p25
    $region11: #{tpu_custom_call.1} parent=1 // pred_check_branch
      %28 = sbr.rel (%p26) target = $region13
    $region12: #{tpu_custom_call.1} parent=1 // pred_region
      %s29 = scalar_lea.smem [#allocation2], 0
      %30 = sst [smem:[%s29]] 0.0
      %s31 = scalar_lea.smem [#allocation2], 1
      %32 = sst [smem:[%s31]] 0.0
    $region13: #{tpu_custom_call.1} parent=1 // pred_fallthru
      _
    %v33 = vld [vmem:[#allocation3] sm:$0xff]
    %v34 = vld [vmem:[#allocation3 + $0x8] sm:$0xff]
    %s35 = sld [smem:[#allocation2]]
    %vm36 = vcmask 130048
    %v37 = vsel %vm36, %v33, 0.0
    %v38 = vsel %vm36, %v34, 0.0
    %v39 = vadd.f32 %v37, %v38
    %40 = vadd.xlane.f32.xlu0 %v39
    %v41 = vpop.xlane.xlu0 %40
    %v42 = vrot.slane %v41, 4
    %v43 = vadd.f32 %v41, %v42
    %v44 = vrot.slane %v43, 2
    %v45 = vadd.f32 %v43, %v44
    %v46 = vrot.slane %v45, 1
    %v47 = vadd.f32 %v45, %v46
    %s48 = vtos %v47
    %s49 = sadd.f32 %s35, %s48
    %s50 = scalar_lea.smem [#allocation2], 0
    %51 = sst [smem:[%s50]] %s49
    %s52 = sld [smem:[#allocation2 + $0x1]]
    %v53 = vmul.f32 %v33, %v33
    %v54 = vmul.f32 %v34, %v34
    %v55 = vsel %vm36, %v53, 0.0
    %v56 = vsel %vm36, %v54, 0.0
    %v57 = vadd.f32 %v55, %v56
    %58 = vadd.xlane.f32.xlu0 %v57
    %v59 = vpop.xlane.xlu0 %58
    %v60 = vrot.slane %v59, 4
    %v61 = vadd.f32 %v59, %v60
    %v62 = vrot.slane %v61, 2
    %v63 = vadd.f32 %v61, %v62
    %v64 = vrot.slane %v63, 1
    %v65 = vadd.f32 %v63, %v64
    %s66 = vtos %v65
    %s67 = sadd.f32 %s52, %s66
    %s68 = scalar_lea.smem [#allocation2], 1
    %69 = sst [smem:[%s68]] %s67
    // Predicated region
    $region14: #{tpu_custom_call.1} parent=1 // pred_check
      %p70 = pneg %p25
    $region15: #{tpu_custom_call.1} parent=1 // pred_check_branch
      %72 = sbr.rel (%p70) target = $region17
    $region16: #{tpu_custom_call.1} parent=1 // pred_region
      %s73 = sld [smem:[#allocation2]]
      %v74 = vrcp.pop 256.0
      %v75 = vmul.f32 256.0, %v74
      %v76 = vsub.f32 1.0, %v75
      %v77 = vmul.f32 %v74, %v76
      %v78 = vadd.f32 %v74, %v77
      %vm79 = vweird.f32 %v74
      %v80 = vsel %vm79, %v74, %v78
      %s81 = vtos %v80
      %s82 = smul.f32 %s73, %s81
      %s83 = sld [smem:[#allocation2 + $0x1]]
      %v84 = vrcp.pop 256.0
      %v85 = vmul.f32 256.0, %v84
      %v86 = vsub.f32 1.0, %v85
      %v87 = vmul.f32 %v84, %v86
      %v88 = vadd.f32 %v84, %v87
      %vm89 = vweird.f32 %v84
      %v90 = vsel %vm89, %v84, %v88
      %s91 = vtos %v90
      %s92 = smul.f32 %s83, %s91
      %s93 = smul.f32 %s82, %s82
      %s94 = ssub.f32 %s92, %s93
      %s95 = scalar_lea.smem [#allocation6], 0
      %96 = sst [smem:[%s95]] %s82
      %s97 = smax.f32 %s94, 0.0
      %s98 = scalar_lea.smem [#allocation6], 1
      %99 = sst [smem:[%s98]] %s97
    $region17: #{tpu_custom_call.1} parent=1 // pred_fallthru
      _
    // Predicated region
    $region18: #{tpu_custom_call.1} parent=1 // pred_check
      _
    $region19: #{tpu_custom_call.1} parent=1 // pred_check_branch
      %101 = sbr.rel (0) target = $region21
    $region20: #{tpu_custom_call.1} parent=1 // pred_region
      %103 = vsyncadd [#allocation5], 0
      %s105 = sshll.u32 %s1, 4
      %s106 = int_to_ptr.hbm [resolvable:$true] %s105
      %108 = dma.smem_to_hbm [#allocation6], 16, %s106, [#allocation5]
    $region21: #{tpu_custom_call.1} parent=1 // pred_fallthru
      _
    // Predicated region
    $region22: #{tpu_custom_call.1} parent=1 // pred_check
      _
    $region23: #{tpu_custom_call.1} parent=1 // pred_check_branch
      %110 = sbr.rel (0) target = $region25
    $region24: #{tpu_custom_call.1} parent=1 // pred_region
      %112 = dma.done [#allocation5], 16
    $region25: #{tpu_custom_call.1} parent=1 // pred_fallthru
      _
    %113 = sfence
    %114 = vsyncpa [#allocation4], 1
    %115 = vsyncpa [#allocation5], 1

</llo_original>
